<compile_context>
chip_gen: v6e
topology: v6e:2x2x1
jax: 0.10.0
libtpu: 0.0.40
codegen_flags: <defaults>
</compile_context>

<pallas_src>
import functools

import jax
import jax.numpy as jnp
from jax.experimental import pallas as pl
from jax.experimental.pallas import tpu as pltpu

BN_EPS = 1e-5

# Whole-array-in-VMEM spec: no blocking, no double-buffering (grid=()).
_VMEM_SPEC = pl.BlockSpec(memory_space=pltpu.MemorySpace.VMEM)


def _round_up(n, m):
    return ((n + m - 1) // m) * m


def _pad_to(a, target_shape):
    pads = [(0, t - s) for s, t in zip(a.shape, target_shape)]
    return jnp.pad(a, pads)


def _predictor_decoder_kernel(x_ref, w1_ref, w2_ref, p_ref, o_ref,
                              *, h_pad, l_pad, inv_b):
    # Packed param slab rows: 0 = b1, 1 = gamma, 2 = beta, 3 = b2 (all f32).
    b1 = p_ref[0:1, :h_pad]
    gamma = p_ref[1:2, :h_pad]
    beta = p_ref[2:3, :h_pad]
    b2 = p_ref[3:4, :l_pad]

    # fc1: bf16 [B, Vp] @ bf16 [Vp, Hp] -> f32, + b1.
    # Padded columns of h are exactly 0 (padded weight cols / bias are 0).
    h = jnp.dot(x_ref[...], w1_ref[...],
                preferred_element_type=jnp.float32) + b1

    # BatchNorm1d (training mode): single-pass batch stats, folded affine.
    s = jnp.sum(h, axis=0, keepdims=True)             # [1, Hp]
    ss = jnp.sum(h * h, axis=0, keepdims=True)        # [1, Hp]
    mean = s * inv_b
    var = jnp.maximum(ss * inv_b - mean * mean, 0.0)  # biased var (PyTorch train)
    scale = gamma * jax.lax.rsqrt(var + BN_EPS)       # gamma / sqrt(var + eps)
    shift = beta - mean * scale
    # normalize + affine + ReLU: one FMA per element, then max (padded cols stay 0).
    h_act = jnp.maximum(h * scale + shift, 0.0)

    # fc2: bf16 [B, Hp] @ bf16 [Hp, Lp] -> f32, + b2, then sigmoid via one EUP tanh.
    z = jnp.dot(h_act.astype(jnp.bfloat16), w2_ref[...],
                preferred_element_type=jnp.float32) + b2
    o_ref[...] = 0.5 * jnp.tanh(0.5 * z) + 0.5


def prepare_params(w1, b1, gamma, beta, w2, b2):
    """One-time parameter prep: lane-dense pad + bf16 weights, packed f32 slab.

    w1: [V, H], w2: [H, L] (already laid out as x @ w1, h @ w2)."""
    V, H = w1.shape
    L = w2.shape[1]
    V_pad = _round_up(V, 128)
    H_pad = _round_up(H, 128)
    L_pad = _round_up(L, 128)
    P = max(H_pad, L_pad)

    w1_p = _pad_to(w1.astype(jnp.float32), (V_pad, H_pad)).astype(jnp.bfloat16)
    w2_p = _pad_to(w2.astype(jnp.float32), (H_pad, L_pad)).astype(jnp.bfloat16)

    # Pack the four row-vector params into one sublane-aligned (8, P) f32 slab
    # -> one DMA instead of four tile-padded ones.
    params = jnp.zeros((8, P), jnp.float32)
    params = params.at[0, :H].set(b1.reshape(-1).astype(jnp.float32))
    params = params.at[1, :H].set(gamma.reshape(-1).astype(jnp.float32))
    params = params.at[2, :H].set(beta.reshape(-1).astype(jnp.float32))
    params = params.at[3, :L].set(b2.reshape(-1).astype(jnp.float32))

    return w1_p, w2_p, params


@functools.partial(jax.jit, static_argnames=("latent_dim",))
def predictor_decoder_fwd(x, w1_p, w2_p, params, *, latent_dim):
    """PredictorDecoder forward. x: [B, V] f32; weights pre-prepped."""
    B, V = x.shape
    V_pad, H_pad = w1_p.shape
    L_pad = w2_p.shape[1]
    P = params.shape[1]

    x_b = x.astype(jnp.bfloat16)
    if V != V_pad:  # skip the pad entirely when V is already lane-dense
        x_b = jnp.pad(x_b, ((0, 0), (0, V_pad - V)))

    kernel = functools.partial(_predictor_decoder_kernel,
                               h_pad=H_pad, l_pad=L_pad, inv_b=1.0 / B)

    cost = pl.CostEstimate(
        flops=2 * B * V_pad * H_pad + 2 * B * H_pad * L_pad + 10 * B * H_pad,
        transcendentals=B * L_pad,
        bytes_accessed=2 * (B * V_pad + V_pad * H_pad + H_pad * L_pad)
                       + 4 * (8 * P + B * L_pad),
    )

    out_pad = pl.pallas_call(
        kernel,
        out_shape=jax.ShapeDtypeStruct((B, L_pad), jnp.float32),
        in_specs=[_VMEM_SPEC, _VMEM_SPEC, _VMEM_SPEC, _VMEM_SPEC],
        out_specs=_VMEM_SPEC,
        cost_estimate=cost,
    )(x_b, w1_p, w2_p, params)

    return out_pad[:, :latent_dim]


def init_params(key, variable_dim, latent_dim):
    """Deterministic init mimicking nn.Linear default (U(-1/sqrt(fan_in), +))."""
    hidden = latent_dim // 4
    k1, k2, k3, k4 = jax.random.split(key, 4)

    bound1 = 1.0 / jnp.sqrt(variable_dim)
    w1 = jax.random.uniform(k1, (variable_dim, hidden), jnp.float32,
                            -bound1, bound1)
    b1 = jax.random.uniform(k2, (hidden,), jnp.float32, -bound1, bound1)

    gamma = jnp.ones((hidden,), jnp.float32)   # BatchNorm1d weight init
    beta = jnp.zeros((hidden,), jnp.float32)   # BatchNorm1d bias init

    bound2 = 1.0 / jnp.sqrt(hidden)
    w2 = jax.random.uniform(k3, (hidden, latent_dim), jnp.float32,
                            -bound2, bound2)
    b2 = jax.random.uniform(k4, (latent_dim,), jnp.float32, -bound2, bound2)

    return w1, b1, gamma, beta, w2, b2


if __name__ == "__main__":
    # Small shapes consistent with the module: batch=8, variable_dim=32,
    # latent_dim=32 (so hidden = latent_dim // 4 = 8).
    B, variable_dim, latent_dim = 8, 32, 32

    key = jax.random.PRNGKey(0)
    kx, kp = jax.random.split(key)
    x = jax.random.normal(kx, (B, variable_dim), jnp.float32)
    w1, b1, gamma, beta, w2, b2 = init_params(kp, variable_dim, latent_dim)

    # One-time parameter prep (hoisted out of the per-forward path).
    w1_p, w2_p, slab = prepare_params(w1, b1, gamma, beta, w2, b2)

    out = predictor_decoder_fwd(x, w1_p, w2_p, slab, latent_dim=latent_dim)
    out = jax.block_until_ready(out)

    # Pure-JAX f32 reference of the same forward pass (PyTorch training-mode BN).
    h = x @ w1 + b1[None, :]
    mean = jnp.mean(h, axis=0, keepdims=True)
    var = jnp.mean((h - mean) ** 2, axis=0, keepdims=True)
    h = (h - mean) / jnp.sqrt(var + BN_EPS) * gamma[None, :] + beta[None, :]
    h = jnp.maximum(h, 0.0)
    ref = jax.nn.sigmoid(h @ w2 + b2[None, :])

    assert out.shape == (B, latent_dim)
    # bf16 MXU operands -> allow small rounding vs the f32 reference.
    assert jnp.allclose(out, ref, atol=2e-2, rtol=2e-2), \
        float(jnp.max(jnp.abs(out - ref)))
    print("KERNEL_OK")
</pallas_src>

<mosaic_0001>
module attributes {stable_mosaic.version = 11 : i64} {
  func.func @_predictor_decoder_kernel(%arg0: memref<8x128xbf16, #tpu.memory_space<vmem>>, %arg1: memref<128x128xbf16, #tpu.memory_space<vmem>>, %arg2: memref<128x128xbf16, #tpu.memory_space<vmem>>, %arg3: memref<8x128xf32, #tpu.memory_space<vmem>>, %arg4: memref<8x128xf32, #tpu.memory_space<vmem>>) attributes {dimension_semantics = [], scalar_prefetch = 0 : i64, scratch_operands = 0 : i64, tpu.core_type = #tpu.core_type<tc>} {
    %c0 = arith.constant 0 : index
    %c0_0 = arith.constant 0 : index
    %0 = vector.load %arg3[%c0, %c0_0] : memref<8x128xf32, #tpu.memory_space<vmem>>, vector<1x128xf32>
    %c1 = arith.constant 1 : index
    %c0_1 = arith.constant 0 : index
    %1 = vector.load %arg3[%c1, %c0_1] : memref<8x128xf32, #tpu.memory_space<vmem>>, vector<1x128xf32>
    %c2 = arith.constant 2 : index
    %c0_2 = arith.constant 0 : index
    %2 = vector.load %arg3[%c2, %c0_2] : memref<8x128xf32, #tpu.memory_space<vmem>>, vector<1x128xf32>
    %c3 = arith.constant 3 : index
    %c0_3 = arith.constant 0 : index
    %3 = vector.load %arg3[%c3, %c0_3] : memref<8x128xf32, #tpu.memory_space<vmem>>, vector<1x128xf32>
    %c0_4 = arith.constant 0 : index
    %c0_5 = arith.constant 0 : index
    %4 = vector.load %arg0[%c0_4, %c0_5] : memref<8x128xbf16, #tpu.memory_space<vmem>>, vector<8x128xbf16>
    %c0_6 = arith.constant 0 : index
    %c0_7 = arith.constant 0 : index
    %5 = vector.load %arg1[%c0_6, %c0_7] : memref<128x128xbf16, #tpu.memory_space<vmem>>, vector<128x128xbf16>
    %cst = arith.constant dense<0.000000e+00> : vector<8x128xf32>
    %6 = tpu.matmul %4, %5, %cst {dimension_numbers = #tpu.dot_dimension_numbers<[1], [0], [0], [1], [0, 0, 1, 1], [], []>} : vector<8x128xbf16>, vector<128x128xbf16>, vector<8x128xf32> -> vector<8x128xf32>
    %7 = vector.broadcast %0 : vector<1x128xf32> to vector<8x128xf32>
    %8 = arith.addf %6, %7 : vector<8x128xf32>
    %cst_8 = arith.constant dense<0.000000e+00> : vector<128xf32>
    %9 = vector.multi_reduction <add>, %8, %cst_8 [0] : vector<8x128xf32> to vector<128xf32>
    %10 = vector.shape_cast %9 : vector<128xf32> to vector<1x128xf32>
    %11 = arith.mulf %8, %8 : vector<8x128xf32>
    %cst_9 = arith.constant dense<0.000000e+00> : vector<128xf32>
    %12 = vector.multi_reduction <add>, %11, %cst_9 [0] : vector<8x128xf32> to vector<128xf32>
    %13 = vector.shape_cast %12 : vector<128xf32> to vector<1x128xf32>
    %cst_10 = arith.constant 1.250000e-01 : f32
    %14 = vector.broadcast %cst_10 : f32 to vector<1x128xf32>
    %15 = arith.mulf %10, %14 : vector<1x128xf32>
    %cst_11 = arith.constant 1.250000e-01 : f32
    %16 = vector.broadcast %cst_11 : f32 to vector<1x128xf32>
    %17 = arith.mulf %13, %16 : vector<1x128xf32>
    %18 = arith.mulf %15, %15 : vector<1x128xf32>
    %19 = arith.subf %17, %18 : vector<1x128xf32>
    %cst_12 = arith.constant 0.000000e+00 : f32
    %20 = vector.broadcast %cst_12 : f32 to vector<1x128xf32>
    %21 = arith.maximumf %19, %20 : vector<1x128xf32>
    %cst_13 = arith.constant 9.99999974E-6 : f32
    %22 = vector.broadcast %cst_13 : f32 to vector<1x128xf32>
    %23 = arith.addf %21, %22 : vector<1x128xf32>
    %24 = math.rsqrt %23 : vector<1x128xf32>
    %25 = arith.mulf %1, %24 : vector<1x128xf32>
    %26 = arith.mulf %15, %25 : vector<1x128xf32>
    %27 = arith.subf %2, %26 : vector<1x128xf32>
    %28 = vector.broadcast %25 : vector<1x128xf32> to vector<8x128xf32>
    %29 = arith.mulf %8, %28 : vector<8x128xf32>
    %30 = vector.broadcast %27 : vector<1x128xf32> to vector<8x128xf32>
    %31 = arith.addf %29, %30 : vector<8x128xf32>
    %cst_14 = arith.constant 0.000000e+00 : f32
    %32 = vector.broadcast %cst_14 : f32 to vector<8x128xf32>
    %33 = arith.maximumf %31, %32 : vector<8x128xf32>
    %34 = arith.truncf %33 : vector<8x128xf32> to vector<8x128xbf16>
    %c0_15 = arith.constant 0 : index
    %c0_16 = arith.constant 0 : index
    %35 = vector.load %arg2[%c0_15, %c0_16] : memref<128x128xbf16, #tpu.memory_space<vmem>>, vector<128x128xbf16>
    %cst_17 = arith.constant dense<0.000000e+00> : vector<8x128xf32>
    %36 = tpu.matmul %34, %35, %cst_17 {dimension_numbers = #tpu.dot_dimension_numbers<[1], [0], [0], [1], [0, 0, 1, 1], [], []>} : vector<8x128xbf16>, vector<128x128xbf16>, vector<8x128xf32> -> vector<8x128xf32>
    %37 = vector.broadcast %3 : vector<1x128xf32> to vector<8x128xf32>
    %38 = arith.addf %36, %37 : vector<8x128xf32>
    %cst_18 = arith.constant 5.000000e-01 : f32
    %39 = vector.broadcast %cst_18 : f32 to vector<8x128xf32>
    %40 = arith.mulf %39, %38 : vector<8x128xf32>
    %41 = math.tanh %40 : vector<8x128xf32>
    %cst_19 = arith.constant 5.000000e-01 : f32
    %42 = vector.broadcast %cst_19 : f32 to vector<8x128xf32>
    %43 = arith.mulf %42, %41 : vector<8x128xf32>
    %cst_20 = arith.constant 5.000000e-01 : f32
    %44 = vector.broadcast %cst_20 : f32 to vector<8x128xf32>
    %45 = arith.addf %43, %44 : vector<8x128xf32>
    %c0_21 = arith.constant 0 : index
    %c0_22 = arith.constant 0 : index
    %46 = vector.load %arg4[%c0_21, %c0_22] : memref<8x128xf32, #tpu.memory_space<vmem>>, vector<8x128xf32>
    tpu.vector_store %arg4[%c0_21, %c0_22], %45 {strides = array<i32>} : memref<8x128xf32, #tpu.memory_space<vmem>>, vector<8x128xf32>,
    return
  }
}

</mosaic_0001>

<llo_original>
// kernel: predictor_decoder_fwd.1
$region0: #{predictor_decoder_fwd.1}
  #allocation0 [shape = 'u32[]', space=smem, size = 0x4, offset = 0x4, fixed_abs, tag = 'smem constant byte address 0x4 - core index']
  #allocation1 [shape = 'u32[144,128]{1,0:T(1,128)}', space=vmem, size = 0x12000, scoped, tag = 'internal scratch']
  %s0 = inlined_call_operand.vmem [shape: bf16[8,128], index: 0, kind: input, shape index: {}]
  %s1 = inlined_call_operand.hbm [shape: bf16[128,128], index: 1, kind: input, shape index: {}]
  %s2 = inlined_call_operand.hbm [shape: bf16[128,128], index: 2, kind: input, shape index: {}]
  %s3 = inlined_call_operand.vmem [shape: f32[8,128], index: 3, kind: input, shape index: {}]
  %s4 = inlined_call_operand.hbm [shape: f32[8,128], index: 4, kind: output, shape index: {}]
  %s5 = sld [smem:[#allocation0]]
  $region34: #{predictor_decoder_fwd.1} parent=0
    _
  %s7 = ssub.s32 1, %s5
  %s8 = scalar_select 0, %s7, %s5
  $region1: #{predictor_decoder_fwd.1} parent=0
    #allocation2 [shape = 'u8[32768]{0}', space=vmem, size = 0x8000, scoped, tag = 'input window, operand 1, single buffered']
    #allocation3 [shape = 's32[1]{0}', space=sflag, size = 0x4, scoped, tag = 'scoped memory for predictor_decoder_fwd.1']
    #allocation4 [shape = 's32[1]{0}', space=sflag, size = 0x4, scoped, tag = 'scoped memory for predictor_decoder_fwd.1']
    #allocation5 [shape = 'u8[32768]{0}', space=vmem, size = 0x8000, scoped, tag = 'input window, operand 2, single buffered']
    #allocation6 [shape = 's32[1]{0}', space=sflag, size = 0x4, scoped, tag = 'scoped memory for predictor_decoder_fwd.1']
    #allocation7 [shape = 'u8[4096]{0}', space=vmem, size = 0x1000, scoped, tag = 'output window, operand 0, single buffered']
    %9 = vsyncpa [#allocation3], 0
    %10 = vsyncpa [#allocation6], 0
    %11 = vsyncpa [#allocation4], 0
    // Predicated region
    $region2: #{predictor_decoder_fwd.1} parent=1 // pred_check
      _
    $region3: #{predictor_decoder_fwd.1} parent=1 // pred_check_branch
      %13 = sbr.rel (0) target = $region5
    $region4: #{predictor_decoder_fwd.1} parent=1 // pred_region
      _
    $region5: #{predictor_decoder_fwd.1} parent=1 // pred_fallthru
      _
    // Predicated region
    $region6: #{predictor_decoder_fwd.1} parent=1 // pred_check
      _
    $region7: #{predictor_decoder_fwd.1} parent=1 // pred_check_branch
      %15 = sbr.rel (0) target = $region9
    $region8: #{predictor_decoder_fwd.1} parent=1 // pred_region
      %s17 = ssub.s32 1024, 1024
      %18 = vsyncadd [#allocation3], %s17
      %s19 = sshll.u32 [#allocation2], 4
      %s20 = int_to_ptr.vmem [resolvable:$true] %s19
      %25 = dma.hbm_to_vmem [thread:$0]  %s1, 1024, %s20, [#allocation3], 64, 64, 4
    $region9: #{predictor_decoder_fwd.1} parent=1 // pred_fallthru
      _
    // Predicated region
    $region10: #{predictor_decoder_fwd.1} parent=1 // pred_check
      _
    $region11: #{predictor_decoder_fwd.1} parent=1 // pred_check_branch
      %27 = sbr.rel (0) target = $region13
    $region12: #{predictor_decoder_fwd.1} parent=1 // pred_region
      %s29 = ssub.s32 1024, 1024
      %30 = vsyncadd [#allocation6], %s29
      %s31 = sshll.u32 [#allocation5], 4
      %s32 = int_to_ptr.vmem [resolvable:$true] %s31
      %37 = dma.hbm_to_vmem [thread:$0]  %s2, 1024, %s32, [#allocation6], 64, 64, 4
    $region13: #{predictor_decoder_fwd.1} parent=1 // pred_fallthru
      _
    // Predicated region
    $region14: #{predictor_decoder_fwd.1} parent=1 // pred_check
      _
    $region15: #{predictor_decoder_fwd.1} parent=1 // pred_check_branch
      %39 = sbr.rel (0) target = $region17
    $region16: #{predictor_decoder_fwd.1} parent=1 // pred_region
      _
    $region17: #{predictor_decoder_fwd.1} parent=1 // pred_fallthru
      _
    // Predicated region
    $region18: #{predictor_decoder_fwd.1} parent=1 // pred_check
      _
    $region19: #{predictor_decoder_fwd.1} parent=1 // pred_check_branch
      %41 = sbr.rel (0) target = $region21
    $region20: #{predictor_decoder_fwd.1} parent=1 // pred_region
      %42 = dma.done [#allocation3], 1024
    $region21: #{predictor_decoder_fwd.1} parent=1 // pred_fallthru
      _
    // Predicated region
    $region22: #{predictor_decoder_fwd.1} parent=1 // pred_check
      _
    $region23: #{predictor_decoder_fwd.1} parent=1 // pred_check_branch
      %44 = sbr.rel (0) target = $region25
    $region24: #{predictor_decoder_fwd.1} parent=1 // pred_region
      %45 = dma.done [#allocation6], 1024
    $region25: #{predictor_decoder_fwd.1} parent=1 // pred_fallthru
      _
    %v47 = vld [vmem:[%s3] sm:$0x1]
    %v48 = vld [vmem:[%s3 + $0x1] sm:$0x1]
    %v49 = vld [vmem:[%s3 + $0x2] sm:$0x1]
    %v50 = vld [vmem:[%s3 + $0x3] sm:$0x1]
    %v51 = vld [vmem:[%s0] sm:$0xf]
    %v52 = vld [vmem:[#allocation2] sm:$0xf]
    %v53 = vld [vmem:[#allocation2 + $0x4] sm:$0xf]
    %v54 = vld [vmem:[#allocation2 + $0x8] sm:$0xf]
    %v55 = vld [vmem:[#allocation2 + $0xc] sm:$0xf]
    %v56 = vld [vmem:[#allocation2 + $0x10] sm:$0xf]
    %v57 = vld [vmem:[#allocation2 + $0x14] sm:$0xf]
    %v58 = vld [vmem:[#allocation2 + $0x18] sm:$0xf]
    %v59 = vld [vmem:[#allocation2 + $0x1c] sm:$0xf]
    %v60 = vld [vmem:[#allocation2 + $0x20] sm:$0xf]
    %v61 = vld [vmem:[#allocation2 + $0x24] sm:$0xf]
    %v62 = vld [vmem:[#allocation2 + $0x28] sm:$0xf]
    %v63 = vld [vmem:[#allocation2 + $0x2c] sm:$0xf]
    %v64 = vld [vmem:[#allocation2 + $0x30] sm:$0xf]
    %v65 = vld [vmem:[#allocation2 + $0x34] sm:$0xf]
    %v66 = vld [vmem:[#allocation2 + $0x38] sm:$0xf]
    %v67 = vld [vmem:[#allocation2 + $0x3c] sm:$0xf]
    %v68 = vlaneseq
    %v69 = vshrl.u32 %v68, 7
    %v70 = vsub.s32 0, %v69
    %v71 = vrot.slane %v47, %v70
    %v88 = vunpack.c.l.b16 %v52
    %v89 = vunpack.c.l.b16 %v53
    %v90 = vunpack.c.l.b16 %v54
    %v91 = vunpack.c.l.b16 %v55
    %v92 = vunpack.c.l.b16 %v56
    %v93 = vunpack.c.l.b16 %v57
    %v94 = vunpack.c.l.b16 %v58
    %v95 = vunpack.c.l.b16 %v59
    %v96 = vunpack.c.l.b16 %v60
    %v97 = vunpack.c.l.b16 %v61
    %v98 = vunpack.c.l.b16 %v62
    %v99 = vunpack.c.l.b16 %v63
    %v100 = vunpack.c.l.b16 %v64
    %v101 = vunpack.c.l.b16 %v65
    %v102 = vunpack.c.l.b16 %v66
    %v103 = vunpack.c.l.b16 %v67
    %v104 = vpack.c.b16 %v89, %v88
    %v105 = vpack.c.b16 %v91, %v90
    %v106 = vpack.c.b16 %v93, %v92
    %v107 = vpack.c.b16 %v95, %v94
    %v108 = vpack.c.b16 %v97, %v96
    %v109 = vpack.c.b16 %v99, %v98
    %v110 = vpack.c.b16 %v101, %v100
    %v111 = vpack.c.b16 %v103, %v102
    %120 = vmatprep.subr.bf16.mxu0 0
    %121 = vmatpush1.bf16.msra.mxu0 %v111
    %122 = vmatprep.subr.bf16.mxu0 0
    %123 = vmatpush1.bf16.msra.mxu0 %v110
    %124 = vmatprep.subr.bf16.mxu0 0
    %125 = vmatpush1.bf16.msra.mxu0 %v109
    %126 = vmatprep.subr.bf16.mxu0 0
    %127 = vmatpush1.bf16.msra.mxu0 %v108
    %128 = vmatprep.subr.bf16.mxu0 0
    %129 = vmatpush1.bf16.msra.mxu0 %v107
    %130 = vmatprep.subr.bf16.mxu0 0
    %131 = vmatpush1.bf16.msra.mxu0 %v106
    %132 = vmatprep.subr.bf16.mxu0 0
    %133 = vmatpush1.bf16.msra.mxu0 %v105
    %134 = vmatprep.subr.bf16.mxu0 0
    %135 = vmatpush1.bf16.msra.mxu0 %v104
    %136 = vmatprep.subr.bf16.mxu0 0
    %137 = vmatpush2.bf16.msra.mxu0 0
    %138 = vmatprep.subr.bf16.mxu0 0
    %139 = vmatpush2.bf16.msra.mxu0 0
    %140 = vmatprep.subr.bf16.mxu0 0
    %141 = vmatpush2.bf16.msra.mxu0 0
    %142 = vmatprep.subr.bf16.mxu0 0
    %143 = vmatpush2.bf16.msra.mxu0 0
    %144 = vmatprep.subr.bf16.mxu0 0
    %145 = vmatpush2.bf16.msra.mxu0 0
    %146 = vmatprep.subr.bf16.mxu0 0
    %147 = vmatpush2.bf16.msra.mxu0 0
    %148 = vmatprep.subr.bf16.mxu0 0
    %149 = vmatpush2.bf16.msra.mxu0 0
    %150 = vmatprep.subr.bf16.mxu0 0
    %151 = vmatpush2.bf16.msra.mxu0 0
    %152 = vmatprep.mubr.bf16.mxu0 0
    %153 = vmatmul.mubr.bf16.gmra.mxu0 %v51
    %v154 = vpop.f32.mrf.mxu0
    %v155 = vadd.f32 %v71, %v154
    %v156 = vpop.f32.mrf.mxu0
    %v157 = vpop.f32.mrf.mxu0
    %v158 = vpop.f32.mrf.mxu0
    %159 = vdwg.mxu0
    %v160 = vrot.slane %v155, 4
    %v161 = vadd.f32 %v155, %v160
    %v162 = vrot.slane %v161, 2
    %v163 = vadd.f32 %v161, %v162
    %v164 = vrot.slane %v163, 1
    %v165 = vadd.f32 %v163, %v164
    %v166 = vmul.f32 %v155, %v155
    %v167 = vrot.slane %v166, 4
    %v168 = vadd.f32 %v166, %v167
    %v169 = vrot.slane %v168, 2
    %v170 = vadd.f32 %v168, %v169
    %v171 = vrot.slane %v170, 1
    %v172 = vadd.f32 %v170, %v171
    %v173 = vmul.f32 %v165, 0.125
    %v174 = vmul.f32 %v172, 0.125
    %v175 = vmul.f32 %v173, %v173
    %v176 = vsub.f32 %v174, %v175
    %v177 = vmax.f32 %v176, 0.0
    %v178 = vadd.f32 %v177, 1e-05
    %v179 = vrsqrt.pop %v178
    %v180 = vmul.f32 %v48, %v179
    %v181 = vmul.f32 %v173, %v180
    %v182 = vsub.f32 %v49, %v181
    %v183 = vlaneseq
    %v184 = vshrl.u32 %v183, 7
    %v185 = vsub.s32 0, %v184
    %v186 = vrot.slane %v180, %v185
    %v187 = vmul.f32 %v155, %v186
    %v188 = vlaneseq
    %v189 = vshrl.u32 %v188, 7
    %v190 = vsub.s32 0, %v189
    %v191 = vrot.slane %v182, %v190
    %v192 = vadd.f32 %v187, %v191
    %v193 = vmax.f32 %v192, 0.0
    %v194 = vpack.c.bf16 %v193, %v193
    %v195 = vld [vmem:[#allocation5] sm:$0xf]
    %v196 = vld [vmem:[#allocation5 + $0x4] sm:$0xf]
    %v197 = vld [vmem:[#allocation5 + $0x8] sm:$0xf]
    %v198 = vld [vmem:[#allocation5 + $0xc] sm:$0xf]
    %v199 = vld [vmem:[#allocation5 + $0x10] sm:$0xf]
    %v200 = vld [vmem:[#allocation5 + $0x14] sm:$0xf]
    %v201 = vld [vmem:[#allocation5 + $0x18] sm:$0xf]
    %v202 = vld [vmem:[#allocation5 + $0x1c] sm:$0xf]
    %v203 = vld [vmem:[#allocation5 + $0x20] sm:$0xf]
    %v204 = vld [vmem:[#allocation5 + $0x24] sm:$0xf]
    %v205 = vld [vmem:[#allocation5 + $0x28] sm:$0xf]
    %v206 = vld [vmem:[#allocation5 + $0x2c] sm:$0xf]
    %v207 = vld [vmem:[#allocation5 + $0x30] sm:$0xf]
    %v208 = vld [vmem:[#allocation5 + $0x34] sm:$0xf]
    %v209 = vld [vmem:[#allocation5 + $0x38] sm:$0xf]
    %v210 = vld [vmem:[#allocation5 + $0x3c] sm:$0xf]
    %v211 = vlaneseq
    %v212 = vshrl.u32 %v211, 7
    %v213 = vsub.s32 0, %v212
    %v214 = vrot.slane %v50, %v213
    %v231 = vunpack.c.l.b16 %v195
    %v232 = vunpack.c.l.b16 %v196
    %v233 = vunpack.c.l.b16 %v197
    %v234 = vunpack.c.l.b16 %v198
    %v235 = vunpack.c.l.b16 %v199
    %v236 = vunpack.c.l.b16 %v200
    %v237 = vunpack.c.l.b16 %v201
    %v238 = vunpack.c.l.b16 %v202
    %v239 = vunpack.c.l.b16 %v203
    %v240 = vunpack.c.l.b16 %v204
    %v241 = vunpack.c.l.b16 %v205
    %v242 = vunpack.c.l.b16 %v206
    %v243 = vunpack.c.l.b16 %v207
    %v244 = vunpack.c.l.b16 %v208
    %v245 = vunpack.c.l.b16 %v209
    %v246 = vunpack.c.l.b16 %v210
    %v247 = vpack.c.b16 %v232, %v231
    %v248 = vpack.c.b16 %v234, %v233
    %v249 = vpack.c.b16 %v236, %v235
    %v250 = vpack.c.b16 %v238, %v237
    %v251 = vpack.c.b16 %v240, %v239
    %v252 = vpack.c.b16 %v242, %v241
    %v253 = vpack.c.b16 %v244, %v243
    %v254 = vpack.c.b16 %v246, %v245
    %263 = vmatprep.subr.bf16.mxu0 0
    %264 = vmatpush1.bf16.msra.mxu0 %v254
    %265 = vmatprep.subr.bf16.mxu0 0
    %266 = vmatpush1.bf16.msra.mxu0 %v253
    %267 = vmatprep.subr.bf16.mxu0 0
    %268 = vmatpush1.bf16.msra.mxu0 %v252
    %269 = vmatprep.subr.bf16.mxu0 0
    %270 = vmatpush1.bf16.msra.mxu0 %v251
    %271 = vmatprep.subr.bf16.mxu0 0
    %272 = vmatpush1.bf16.msra.mxu0 %v250
    %273 = vmatprep.subr.bf16.mxu0 0
    %274 = vmatpush1.bf16.msra.mxu0 %v249
    %275 = vmatprep.subr.bf16.mxu0 0
    %276 = vmatpush1.bf16.msra.mxu0 %v248
    %277 = vmatprep.subr.bf16.mxu0 0
    %278 = vmatpush1.bf16.msra.mxu0 %v247
    %279 = vmatprep.subr.bf16.mxu0 0
    %280 = vmatpush2.bf16.msra.mxu0 0
    %281 = vmatprep.subr.bf16.mxu0 0
    %282 = vmatpush2.bf16.msra.mxu0 0
    %283 = vmatprep.subr.bf16.mxu0 0
    %284 = vmatpush2.bf16.msra.mxu0 0
    %285 = vmatprep.subr.bf16.mxu0 0
    %286 = vmatpush2.bf16.msra.mxu0 0
    %287 = vmatprep.subr.bf16.mxu0 0
    %288 = vmatpush2.bf16.msra.mxu0 0
    %289 = vmatprep.subr.bf16.mxu0 0
    %290 = vmatpush2.bf16.msra.mxu0 0
    %291 = vmatprep.subr.bf16.mxu0 0
    %292 = vmatpush2.bf16.msra.mxu0 0
    %293 = vmatprep.subr.bf16.mxu0 0
    %294 = vmatpush2.bf16.msra.mxu0 0
    %295 = vmatprep.mubr.bf16.mxu0 0
    %296 = vmatmul.mubr.bf16.gmra.mxu0 %v194
    %v297 = vpop.f32.mrf.mxu0
    %v298 = vadd.f32 %v214, %v297
    %v299 = vpop.f32.mrf.mxu0
    %v300 = vpop.f32.mrf.mxu0
    %v301 = vpop.f32.mrf.mxu0
    %302 = vdwg.mxu0
    %v303 = vmul.f32 %v298, 0.5
    %v304 = vtanh.pop %v303
    %v305 = vmul.f32 %v304, 0.5
    %v306 = vadd.f32 %v305, 0.5
    %307 = vst [vmem:[#allocation7] sm:$0xff] %v306
    // Predicated region
    $region26: #{predictor_decoder_fwd.1} parent=1 // pred_check
      _
    $region27: #{predictor_decoder_fwd.1} parent=1 // pred_check_branch
      %309 = sbr.rel (0) target = $region29
    $region28: #{predictor_decoder_fwd.1} parent=1 // pred_region
      %s311 = ssub.s32 128, 128
      %312 = vsyncadd [#allocation4], %s311
      %s314 = sshll.u32 [#allocation7], 4
      %s315 = int_to_ptr.vmem [resolvable:$true] %s314
      %317 = dma.vmem_to_hbm [thread:$0]  %s315, 128, %s4, [#allocation4]
    $region29: #{predictor_decoder_fwd.1} parent=1 // pred_fallthru
      _
    // Predicated region
    $region30: #{predictor_decoder_fwd.1} parent=1 // pred_check
      _
    $region31: #{predictor_decoder_fwd.1} parent=1 // pred_check_branch
      %319 = sbr.rel (0) target = $region33
    $region32: #{predictor_decoder_fwd.1} parent=1 // pred_region
      %320 = dma.done [#allocation4], 128
    $region33: #{predictor_decoder_fwd.1} parent=1 // pred_fallthru
      _
    %321 = vsyncpa [#allocation3], 1
    %322 = vsyncpa [#allocation6], 1
    %323 = vsyncpa [#allocation4], 1

</llo_original>
